<compile_context>
chip_gen: v7x
topology: tpu7x:2x2x1
jax: 0.10.0
libtpu: 0.0.40
codegen_flags: <defaults>
</compile_context>

<pallas_src>
import functools

import jax
import jax.numpy as jnp
import numpy as np
from jax.experimental import pallas as pl
from jax.experimental.pallas import tpu as pltpu


def _lightconv_kernel(x_ref, w_ref, b_ref, o_ref, acc_ref, *, kernel_size, head_size):
    # x_ref  : (1, T, Ct)     input tile, HBM dtype (f32 or bf16)
    # w_ref  : (1, K, T, Hp)  softmax'd filters for all (padded) heads, HBM dtype
    # b_ref  : (1, Ct)        bias for this channel tile, f32
    # o_ref  : (1, T, Ct)     output tile, same dtype as x
    # acc_ref: (T, Ct) f32    VMEM scratch accumulator
    T, Ct = acc_ref.shape
    Hp = w_ref.shape[3]
    K = kernel_size
    pad = K // 2
    j = pl.program_id(1)  # channel-tile index

    # One-hot head -> channel expansion for THIS channel tile:
    #   expand[h, c] = 1  iff global channel (j*Ct + c) belongs to head h.
    chan = jax.lax.broadcasted_iota(jnp.int32, (Hp, Ct), 1) + j * Ct
    head_lo = jax.lax.broadcasted_iota(jnp.int32, (Hp, Ct), 0) * head_size
    mask = (chan >= head_lo) & (chan < head_lo + head_size)
    expand = jnp.where(mask, 1.0, 0.0).astype(jnp.bfloat16)  # (Hp, Ct)

    # Accumulator starts at the bias (saves a separate full-tile add at the end).
    acc_ref[...] = jnp.broadcast_to(b_ref[...], (T, Ct))

    for k in range(K):  # K is small and static -> unrolled
        off = k - pad
        n = T - abs(off)
        if n <= 0:
            continue
        o_lo = max(0, -off)  # first valid output row for this tap
        i_lo = max(0, off)   # matching first input row

        wk = w_ref[0, k, o_lo:o_lo + n]  # (n, Hp) per-head weight at the output rows
        if wk.dtype == jnp.float32:
            # Split into bf16 hi/lo so the one-hot MXU expansion is exact (~1e-6 rel)
            # independently of the default f32 matmul precision.
            w_hi = wk.astype(jnp.bfloat16)
            w_lo = (wk - w_hi.astype(jnp.float32)).astype(jnp.bfloat16)
            wk_c = (jnp.dot(w_hi, expand, preferred_element_type=jnp.float32)
                    + jnp.dot(w_lo, expand, preferred_element_type=jnp.float32))
        else:
            wk_c = jnp.dot(wk.astype(jnp.bfloat16), expand,
                           preferred_element_type=jnp.float32)  # (n, Ct)

        xs = x_ref[0, i_lo:i_lo + n, :].astype(jnp.float32)     # (n, Ct), cast per tap only
        acc_ref[o_lo:o_lo + n, :] += wk_c * xs

    o_ref[0] = acc_ref[...].astype(o_ref.dtype)


def _round_up(x, m):
    return (x + m - 1) // m * m


def _choose_c_tile(C, T, itemsize, vmem_budget_bytes=16 * 1024 * 1024):
    """Largest lane-dense channel tile (multiple of 128 dividing C) whose double-buffered
    in/out blocks + f32 accumulator fit the VMEM budget; falls back to the full channel dim."""
    if C % 128 != 0:
        return C
    per_chan = T * (4 * itemsize + 4)  # 2x-buffered input + output + f32 scratch
    c = 128
    while (c * 2 <= C) and (C % (c * 2) == 0) and ((c * 2) * per_chan <= vmem_budget_bytes):
        c *= 2
    return c


def light_conv(x, filters, bias, *, kernel_size, head_size, num_heads, c_tile=None):
    """x: (B, T, C) with C = num_heads*head_size (channels-last);
    filters: (B, T, num_heads*kernel_size); bias: (C,). Returns (B, T, C) in x.dtype."""
    B, T, C = x.shape
    assert C == num_heads * head_size
    assert kernel_size % 2 == 1, "reference Unfold/reshape path implies odd kernel_size"

    if c_tile is None:
        c_tile = _choose_c_tile(C, T, x.dtype.itemsize)
    assert C % c_tile == 0
    assert c_tile == C or c_tile % 128 == 0
    num_c_tiles = C // c_tile

    # Tap softmax in the wrapper (exact; filters are only ~K/head_size the size of x).
    w = jax.nn.softmax(
        filters.reshape(B, T, num_heads, kernel_size).astype(jnp.float32), axis=-1)
    w = jnp.transpose(w, (0, 3, 1, 2)).astype(x.dtype)  # (B, K, T, H): taps leading
    h_pad = _round_up(num_heads, 16)                    # pad heads for clean MXU tiling
    if h_pad != num_heads:
        w = jnp.pad(w, ((0, 0), (0, 0), (0, 0), (0, h_pad - num_heads)))

    b2 = bias.reshape(1, C).astype(jnp.float32)

    kernel = functools.partial(
        _lightconv_kernel, kernel_size=kernel_size, head_size=head_size)

    out = pl.pallas_call(
        kernel,
        out_shape=jax.ShapeDtypeStruct((B, T, C), x.dtype),
        grid=(B, num_c_tiles),
        in_specs=[
            pl.BlockSpec((1, T, c_tile), lambda b, j: (b, 0, j)),
            # All (padded) heads' weights; the index does not depend on j, so the block is
            # not re-fetched while sweeping the channel tiles of one batch element.
            pl.BlockSpec((1, kernel_size, T, h_pad), lambda b, j: (b, 0, 0, 0)),
            pl.BlockSpec((1, c_tile), lambda b, j: (0, j)),
        ],
        out_specs=pl.BlockSpec((1, T, c_tile), lambda b, j: (b, 0, j)),
        scratch_shapes=[pltpu.VMEM((T, c_tile), jnp.float32)],
        compiler_params=pltpu.CompilerParams(
            dimension_semantics=("parallel", "parallel"),
            vmem_limit_bytes=64 * 1024 * 1024,
        ),
    )(x, w, b2)

    return out


def light_conv_ref(x, filters, bias, *, kernel_size, head_size, num_heads):
    """Pure-JAX reference mirroring the PyTorch forward (f32 math)."""
    B, T, C = x.shape
    pad = kernel_size // 2
    w = jax.nn.softmax(
        filters.reshape(B, T, num_heads, kernel_size).astype(jnp.float32), axis=-1)
    xp = jnp.pad(x.astype(jnp.float32).reshape(B, T, num_heads, head_size),
                 ((0, 0), (pad, pad), (0, 0), (0, 0)))
    out = jnp.zeros((B, T, num_heads, head_size), jnp.float32)
    for k in range(kernel_size):
        out = out + w[:, :, :, k:k + 1] * xp[:, k:k + T]
    out = out.reshape(B, T, C) + bias.reshape(1, 1, -1).astype(jnp.float32)
    return out.astype(x.dtype)


if __name__ == "__main__":
    key = jax.random.PRNGKey(0)

    def run_case(k, B, T, num_heads, head_size, kernel_size, dtype, c_tile=None,
                 rtol=2e-4, atol=2e-4):
        C = num_heads * head_size
        kx, kf, kb = jax.random.split(k, 3)
        x = jax.random.normal(kx, (B, T, C), dtype=jnp.float32).astype(dtype)
        filters = jax.random.normal(kf, (B, T, num_heads * kernel_size), dtype=jnp.float32)
        # bias is a learnable Parameter (zero-init in the module); use a non-trivial value
        # so the bias path is actually exercised.
        bias = 0.1 * jax.random.normal(kb, (C,), dtype=jnp.float32)

        out = light_conv(x, filters, bias, kernel_size=kernel_size,
                         head_size=head_size, num_heads=num_heads, c_tile=c_tile)
        out = jax.block_until_ready(out)
        ref = light_conv_ref(x, filters, bias, kernel_size=kernel_size,
                             head_size=head_size, num_heads=num_heads)
        np.testing.assert_allclose(np.asarray(out.astype(jnp.float32)),
                                   np.asarray(ref.astype(jnp.float32)),
                                   rtol=rtol, atol=atol)

    k1, k2, k3 = jax.random.split(key, 3)
    # Small config matching the module-scale example.
    run_case(k1, B=2, T=16, num_heads=4, head_size=8, kernel_size=3, dtype=jnp.float32)
    # Lane-dense, multi-channel-tile config (exercises the program_id-based head mapping).
    run_case(k2, B=2, T=32, num_heads=32, head_size=8, kernel_size=5,
             dtype=jnp.float32, c_tile=128)
    # bf16 I/O path (halves HBM traffic on v6e/v7x); accumulation stays f32 in-kernel.
    run_case(k3, B=2, T=32, num_heads=32, head_size=8, kernel_size=5,
             dtype=jnp.bfloat16, c_tile=128, rtol=3e-2, atol=3e-2)

    print("KERNEL_OK")
</pallas_src>

<mosaic_0001>
module attributes {stable_mosaic.version = 11 : i64} {
  func.func @_lightconv_kernel(%arg0: i32, %arg1: i32, %arg2: memref<1x16x32xf32, #tpu.memory_space<vmem>>, %arg3: memref<1x3x16x16xf32, #tpu.memory_space<vmem>>, %arg4: memref<1x32xf32, #tpu.memory_space<vmem>>, %arg5: memref<1x16x32xf32, #tpu.memory_space<vmem>>, %arg6: memref<16x32xf32, #tpu.memory_space<vmem>>) attributes {dimension_semantics = [#tpu.dimension_semantics<parallel>, #tpu.dimension_semantics<parallel>], iteration_bounds = array<i64: 2, 1>, scalar_prefetch = 0 : i64, scratch_operands = 1 : i64, tpu.core_type = #tpu.core_type<tc>, window_params = [{transform_indices = @transform_0, window_bounds = array<i64: 1, 16, 32>}, {transform_indices = @transform_1, window_bounds = array<i64: 1, 3, 16, 16>}, {transform_indices = @transform_2, window_bounds = array<i64: 1, 32>}, {transform_indices = @transform_3, window_bounds = array<i64: 1, 16, 32>}]} {
    %0 = tpu.iota {dimensions = array<i32: 1>} : vector<16x32xi32>
    %c32_i32 = arith.constant 32 : i32
    %1 = arith.muli %arg1, %c32_i32 : i32
    %2 = vector.broadcast %1 : i32 to vector<16x32xi32>
    %3 = arith.addi %0, %2 : vector<16x32xi32>
    %4 = tpu.iota {dimensions = array<i32: 0>} : vector<16x32xi32>
    %c8_i32 = arith.constant 8 : i32
    %5 = vector.broadcast %c8_i32 : i32 to vector<16x32xi32>
    %6 = arith.muli %4, %5 : vector<16x32xi32>
    %7 = arith.cmpi sge, %3, %6 : vector<16x32xi32>
    %c8_i32_0 = arith.constant 8 : i32
    %8 = vector.broadcast %c8_i32_0 : i32 to vector<16x32xi32>
    %9 = arith.addi %6, %8 : vector<16x32xi32>
    %10 = arith.cmpi slt, %3, %9 : vector<16x32xi32>
    %11 = arith.andi %7, %10 : vector<16x32xi1>
    %cst = arith.constant 1.000000e+00 : f32
    %cst_1 = arith.constant 0.000000e+00 : f32
    %12 = vector.broadcast %cst : f32 to vector<16x32xf32>
    %13 = vector.broadcast %cst_1 : f32 to vector<16x32xf32>
    %14 = arith.select %11, %12, %13 : vector<16x32xi1>, vector<16x32xf32>
    %15 = arith.truncf %14 : vector<16x32xf32> to vector<16x32xbf16>
    %c0 = arith.constant 0 : index
    %c0_2 = arith.constant 0 : index
    %16 = vector.load %arg4[%c0, %c0_2] : memref<1x32xf32, #tpu.memory_space<vmem>>, vector<1x32xf32>
    %17 = vector.shape_cast %16 : vector<1x32xf32> to vector<1x32xf32>
    %18 = vector.broadcast %17 : vector<1x32xf32> to vector<16x32xf32>
    %c0_3 = arith.constant 0 : index
    %c0_4 = arith.constant 0 : index
    %19 = vector.load %arg6[%c0_3, %c0_4] : memref<16x32xf32, #tpu.memory_space<vmem>>, vector<16x32xf32>
    tpu.vector_store %arg6[%c0_3, %c0_4], %18 {strides = array<i32>} : memref<16x32xf32, #tpu.memory_space<vmem>>, vector<16x32xf32>,
    %c0_5 = arith.constant 0 : index
    %c0_6 = arith.constant 0 : index
    %c1 = arith.constant 1 : index
    %c0_7 = arith.constant 0 : index
    %20 = vector.load %arg3[%c0_5, %c0_6, %c1, %c0_7] : memref<1x3x16x16xf32, #tpu.memory_space<vmem>>, vector<1x1x15x16xf32>
    %21 = vector.shape_cast %20 : vector<1x1x15x16xf32> to vector<15x16xf32>
    %22 = arith.truncf %21 : vector<15x16xf32> to vector<15x16xbf16>
    %23 = arith.extf %22 : vector<15x16xbf16> to vector<15x16xf32>
    %24 = arith.subf %21, %23 : vector<15x16xf32>
    %25 = arith.truncf %24 : vector<15x16xf32> to vector<15x16xbf16>
    %cst_8 = arith.constant dense<0.000000e+00> : vector<15x32xf32>
    %26 = tpu.matmul %22, %15, %cst_8 {dimension_numbers = #tpu.dot_dimension_numbers<[1], [0], [0], [1], [0, 0, 1, 1], [], []>} : vector<15x16xbf16>, vector<16x32xbf16>, vector<15x32xf32> -> vector<15x32xf32>
    %cst_9 = arith.constant dense<0.000000e+00> : vector<15x32xf32>
    %27 = tpu.matmul %25, %15, %cst_9 {dimension_numbers = #tpu.dot_dimension_numbers<[1], [0], [0], [1], [0, 0, 1, 1], [], []>} : vector<15x16xbf16>, vector<16x32xbf16>, vector<15x32xf32> -> vector<15x32xf32>
    %28 = arith.addf %26, %27 : vector<15x32xf32>
    %c0_10 = arith.constant 0 : index
    %c0_11 = arith.constant 0 : index
    %c0_12 = arith.constant 0 : index
    %29 = vector.load %arg2[%c0_10, %c0_11, %c0_12] : memref<1x16x32xf32, #tpu.memory_space<vmem>>, vector<1x15x32xf32>
    %30 = vector.shape_cast %29 : vector<1x15x32xf32> to vector<15x32xf32>
    %c1_13 = arith.constant 1 : index
    %c0_14 = arith.constant 0 : index
    %31 = vector.load %arg6[%c1_13, %c0_14] : memref<16x32xf32, #tpu.memory_space<vmem>>, vector<15x32xf32>
    %32 = arith.mulf %28, %30 : vector<15x32xf32>
    %33 = arith.addf %31, %32 : vector<15x32xf32>
    %c1_15 = arith.constant 1 : index
    %c0_16 = arith.constant 0 : index
    %34 = vector.load %arg6[%c1_15, %c0_16] : memref<16x32xf32, #tpu.memory_space<vmem>>, vector<15x32xf32>
    tpu.vector_store %arg6[%c1_15, %c0_16], %33 {strides = array<i32>} : memref<16x32xf32, #tpu.memory_space<vmem>>, vector<15x32xf32>,
    %c0_17 = arith.constant 0 : index
    %c1_18 = arith.constant 1 : index
    %c0_19 = arith.constant 0 : index
    %c0_20 = arith.constant 0 : index
    %35 = vector.load %arg3[%c0_17, %c1_18, %c0_19, %c0_20] : memref<1x3x16x16xf32, #tpu.memory_space<vmem>>, vector<1x1x16x16xf32>
    %36 = vector.shape_cast %35 : vector<1x1x16x16xf32> to vector<16x16xf32>
    %37 = arith.truncf %36 : vector<16x16xf32> to vector<16x16xbf16>
    %38 = arith.extf %37 : vector<16x16xbf16> to vector<16x16xf32>
    %39 = arith.subf %36, %38 : vector<16x16xf32>
    %40 = arith.truncf %39 : vector<16x16xf32> to vector<16x16xbf16>
    %cst_21 = arith.constant dense<0.000000e+00> : vector<16x32xf32>
    %41 = tpu.matmul %37, %15, %cst_21 {dimension_numbers = #tpu.dot_dimension_numbers<[1], [0], [0], [1], [0, 0, 1, 1], [], []>} : vector<16x16xbf16>, vector<16x32xbf16>, vector<16x32xf32> -> vector<16x32xf32>
    %cst_22 = arith.constant dense<0.000000e+00> : vector<16x32xf32>
    %42 = tpu.matmul %40, %15, %cst_22 {dimension_numbers = #tpu.dot_dimension_numbers<[1], [0], [0], [1], [0, 0, 1, 1], [], []>} : vector<16x16xbf16>, vector<16x32xbf16>, vector<16x32xf32> -> vector<16x32xf32>
    %43 = arith.addf %41, %42 : vector<16x32xf32>
    %c0_23 = arith.constant 0 : index
    %c0_24 = arith.constant 0 : index
    %c0_25 = arith.constant 0 : index
    %44 = vector.load %arg2[%c0_23, %c0_24, %c0_25] : memref<1x16x32xf32, #tpu.memory_space<vmem>>, vector<1x16x32xf32>
    %45 = vector.shape_cast %44 : vector<1x16x32xf32> to vector<16x32xf32>
    %c0_26 = arith.constant 0 : index
    %c0_27 = arith.constant 0 : index
    %46 = vector.load %arg6[%c0_26, %c0_27] : memref<16x32xf32, #tpu.memory_space<vmem>>, vector<16x32xf32>
    %47 = arith.mulf %43, %45 : vector<16x32xf32>
    %48 = arith.addf %46, %47 : vector<16x32xf32>
    %c0_28 = arith.constant 0 : index
    %c0_29 = arith.constant 0 : index
    %49 = vector.load %arg6[%c0_28, %c0_29] : memref<16x32xf32, #tpu.memory_space<vmem>>, vector<16x32xf32>
    tpu.vector_store %arg6[%c0_28, %c0_29], %48 {strides = array<i32>} : memref<16x32xf32, #tpu.memory_space<vmem>>, vector<16x32xf32>,
    %c0_30 = arith.constant 0 : index
    %c2 = arith.constant 2 : index
    %c0_31 = arith.constant 0 : index
    %c0_32 = arith.constant 0 : index
    %50 = vector.load %arg3[%c0_30, %c2, %c0_31, %c0_32] : memref<1x3x16x16xf32, #tpu.memory_space<vmem>>, vector<1x1x15x16xf32>
    %51 = vector.shape_cast %50 : vector<1x1x15x16xf32> to vector<15x16xf32>
    %52 = arith.truncf %51 : vector<15x16xf32> to vector<15x16xbf16>
    %53 = arith.extf %52 : vector<15x16xbf16> to vector<15x16xf32>
    %54 = arith.subf %51, %53 : vector<15x16xf32>
    %55 = arith.truncf %54 : vector<15x16xf32> to vector<15x16xbf16>
    %cst_33 = arith.constant dense<0.000000e+00> : vector<15x32xf32>
    %56 = tpu.matmul %52, %15, %cst_33 {dimension_numbers = #tpu.dot_dimension_numbers<[1], [0], [0], [1], [0, 0, 1, 1], [], []>} : vector<15x16xbf16>, vector<16x32xbf16>, vector<15x32xf32> -> vector<15x32xf32>
    %cst_34 = arith.constant dense<0.000000e+00> : vector<15x32xf32>
    %57 = tpu.matmul %55, %15, %cst_34 {dimension_numbers = #tpu.dot_dimension_numbers<[1], [0], [0], [1], [0, 0, 1, 1], [], []>} : vector<15x16xbf16>, vector<16x32xbf16>, vector<15x32xf32> -> vector<15x32xf32>
    %58 = arith.addf %56, %57 : vector<15x32xf32>
    %c0_35 = arith.constant 0 : index
    %c1_36 = arith.constant 1 : index
    %c0_37 = arith.constant 0 : index
    %59 = vector.load %arg2[%c0_35, %c1_36, %c0_37] : memref<1x16x32xf32, #tpu.memory_space<vmem>>, vector<1x15x32xf32>
    %60 = vector.shape_cast %59 : vector<1x15x32xf32> to vector<15x32xf32>
    %c0_38 = arith.constant 0 : index
    %c0_39 = arith.constant 0 : index
    %61 = vector.load %arg6[%c0_38, %c0_39] : memref<16x32xf32, #tpu.memory_space<vmem>>, vector<15x32xf32>
    %62 = arith.mulf %58, %60 : vector<15x32xf32>
    %63 = arith.addf %61, %62 : vector<15x32xf32>
    %c0_40 = arith.constant 0 : index
    %c0_41 = arith.constant 0 : index
    %64 = vector.load %arg6[%c0_40, %c0_41] : memref<16x32xf32, #tpu.memory_space<vmem>>, vector<15x32xf32>
    tpu.vector_store %arg6[%c0_40, %c0_41], %63 {strides = array<i32>} : memref<16x32xf32, #tpu.memory_space<vmem>>, vector<15x32xf32>,
    %c0_42 = arith.constant 0 : index
    %c0_43 = arith.constant 0 : index
    %65 = vector.load %arg6[%c0_42, %c0_43] : memref<16x32xf32, #tpu.memory_space<vmem>>, vector<16x32xf32>
    %c0_44 = arith.constant 0 : index
    %c0_45 = arith.constant 0 : index
    %c0_46 = arith.constant 0 : index
    %66 = vector.load %arg5[%c0_44, %c0_45, %c0_46] : memref<1x16x32xf32, #tpu.memory_space<vmem>>, vector<1x16x32xf32>
    %67 = vector.shape_cast %66 : vector<1x16x32xf32> to vector<16x32xf32>
    %68 = vector.shape_cast %65 : vector<16x32xf32> to vector<1x16x32xf32>
    tpu.vector_store %arg5[%c0_44, %c0_45, %c0_46], %68 {strides = array<i32>} : memref<1x16x32xf32, #tpu.memory_space<vmem>>, vector<1x16x32xf32>,
    return
  }
  func.func @transform_0(%arg0: i32, %arg1: i32) -> (i32, i32, i32) {
    %c0_i32 = arith.constant 0 : i32
    %c0_i32_0 = arith.constant 0 : i32
    return %arg0, %c0_i32, %arg1 : i32, i32, i32
  }
  func.func @transform_1(%arg0: i32, %arg1: i32) -> (i32, i32, i32, i32) {
    %c0_i32 = arith.constant 0 : i32
    %c0_i32_0 = arith.constant 0 : i32
    %c0_i32_1 = arith.constant 0 : i32
    %c0_i32_2 = arith.constant 0 : i32
    return %arg0, %c0_i32, %c0_i32_0, %c0_i32_1 : i32, i32, i32, i32
  }
  func.func @transform_2(%arg0: i32, %arg1: i32) -> (i32, i32) {
    %c0_i32 = arith.constant 0 : i32
    %c0_i32_0 = arith.constant 0 : i32
    return %c0_i32, %arg1 : i32, i32
  }
  func.func @transform_3(%arg0: i32, %arg1: i32) -> (i32, i32, i32) {
    %c0_i32 = arith.constant 0 : i32
    %c0_i32_0 = arith.constant 0 : i32
    return %arg0, %c0_i32, %arg1 : i32, i32, i32
  }
}

</mosaic_0001>

<llo_original>
// kernel: tpu_custom_call.1
$region0: #{tpu_custom_call.1}
  #allocation0 [shape = 'u32[]', space=smem, size = 0x4, offset = 0x4, fixed_abs, tag = 'smem constant byte address 0x4 - core index']
  #allocation1 [shape = 'u32[144,128]{1,0:T(1,128)}', space=vmem, size = 0x12000, scoped, tag = 'internal scratch']
  #allocation2 [shape = 'f32[16,32]{1,0:T(8,128)}', space=vmem, size = 0x2000, scoped, tag = 'scratch operand']
  %s0 = inlined_call_operand.hbm [shape: f32[2,16,32], index: 0, kind: input, shape index: {}]
  %s1 = inlined_call_operand.hbm [shape: f32[2,3,16,16], index: 1, kind: input, shape index: {}]
  %s2 = inlined_call_operand.hbm [shape: f32[1,32], index: 2, kind: input, shape index: {}]
  %s3 = inlined_call_operand.hbm [shape: f32[2,16,32], index: 3, kind: output, shape index: {}]
  %s4 = sld [smem:[#allocation0]]
  $region57: #{tpu_custom_call.1} parent=0
    _
  %s6 = ssub.s32 1, %s4
  %s7 = scalar_select 0, %s6, %s4
  $region1: #{tpu_custom_call.1} parent=0
    #allocation3 [shape = 'u8[16384]{0}', space=vmem, size = 0x4000, scoped, tag = 'input window, operand 0']
    #allocation4 [shape = 's32[2]{0}', space=sflag, size = 0x8, scoped, tag = 'scoped memory for tpu_custom_call.1']
    #allocation5 [shape = 's32[2]{0}', space=sflag, size = 0x8, scoped, tag = 'scoped memory for tpu_custom_call.1']
    #allocation6 [shape = 'u8[49152]{0}', space=vmem, size = 0xc000, scoped, tag = 'input window, operand 1']
    #allocation7 [shape = 's32[2]{0}', space=sflag, size = 0x8, scoped, tag = 'scoped memory for tpu_custom_call.1']
    #allocation8 [shape = 'u8[512]{0}', space=vmem, size = 0x400, scoped, tag = 'input window, operand 2, single buffered']
    #allocation9 [shape = 'u8[16384]{0}', space=vmem, size = 0x4000, scoped, tag = 'output window, operand 0']
    %8 = vsyncpa [#allocation4], 0
    %s9 = scalar_lea.sflag [#allocation4], 1
    %10 = vsyncpa %s9, 0
    %11 = vsyncpa [#allocation7], 0
    %s12 = scalar_lea.sflag [#allocation7], 1
    %13 = vsyncpa %s12, 0
    %14 = vsyncpa [#allocation5], 0
    %s15 = scalar_lea.sflag [#allocation5], 1
    %16 = vsyncpa %s15, 0
    loop: start=0, step=1, limit=4
    $region2: #{tpu_custom_call.1} parent=1 // loop_pre_header
      _
    $region3: #{tpu_custom_call.1} parent=1 // loop_header
      %s18 = sphi 0, %s22
      %p19 = scmp.ge.s32.totalorder %s18, 4
      %s25 = sphi 0, %s37
      %s26 = sphi 0, %s33
      %s27 = sphi 0, %s25
      %s28 = sphi 0, %s26
      %s29 = sphi 0, %s27
      %s30 = sphi 0, %s28
      %s42 = sphi 0, %s44
      %s45 = sphi 0, %s42
      %s46 = sphi 0, %s45
      %s62 = sphi 0, %s46
      %s68 = sphi 0, %s70
      %s71 = sphi 0, %s68
      %s72 = sphi 0, %s71
      %s88 = sphi 0, %s72
      %s94 = sphi 0, %s96
      %s97 = sphi 0, %s94
      %s98 = sphi 0, %s97
      %s114 = sphi 0, %s98
      %s122 = sphi 0, %s124
      %s125 = sphi 0, %s122
      %s126 = sphi 0, %s125
      %s142 = sphi 0, %s126
    $region4: #{tpu_custom_call.1} parent=1 // loop_header_branch
      %21 = sbr.rel (%p19) target = $region8
    $region5: #{tpu_custom_call.1} parent=1 // loop_body
      %s23 = ssub.s32 %s18, 1
      %s24 = ssub.s32 %s18, 2
      %s31 = sadd.s32 1, %s26
      %p32 = scmp.ge.s32.totalorder %s31, 1
      %s33 = scalar_select %p32, 0, %s31
      %s34 = sadd.s32 1, %s25
      %s35 = scalar_select %p32, %s34, %s25
      %p36 = scmp.ge.s32.totalorder %s35, 2
      %s37 = scalar_select %p36, 0, %s35
      %s38 = ssub.s32 %s25, %s37
      %s39 = ssub.s32 %s26, %s33
      %s40 = sor.u32 %s38, %s39
      %p41 = scmp.eq.s32.totalorder %s40, 0
      %s43 = sadd.s32 %s42, 1
      %s44 = scalar_select %p41, %s42, %s43
      %p47 = pneg %p41
      %p48 = scmp.eq.s32.totalorder %s18, 1
      %p49 = por %p47, %p48
      %p50 = scmp.ne.s32.totalorder %s42, %s45
      %p51 = scmp.eq.s32.totalorder %s18, 0
      %p52 = por %p50, %p51
      %p53 = scmp.ne.s32.totalorder %s42, %s45
      %p54 = scmp.eq.s32.totalorder %s23, 1
      %p55 = por %p53, %p54
      %p56 = scmp.ne.s32.totalorder %s45, %s46
      %p57 = scmp.eq.s32.totalorder %s23, 0
      %p58 = por %p56, %p57
      %p59 = scmp.ne.s32.totalorder %s45, %s46
      %p60 = scmp.eq.s32.totalorder %s24, 1
      %p61 = por %p59, %p60
      %p63 = scmp.ne.s32.totalorder %s46, %s62
      %p64 = scmp.eq.s32.totalorder %s24, 0
      %p65 = por %p63, %p64
      %s66 = ssub.s32 %s25, %s37
      %p67 = scmp.eq.s32.totalorder %s66, 0
      %s69 = sadd.s32 %s68, 1
      %s70 = scalar_select %p67, %s68, %s69
      %p73 = pneg %p67
      %p74 = scmp.eq.s32.totalorder %s18, 1
      %p75 = por %p73, %p74
      %p76 = scmp.ne.s32.totalorder %s68, %s71
      %p77 = scmp.eq.s32.totalorder %s18, 0
      %p78 = por %p76, %p77
      %p79 = scmp.ne.s32.totalorder %s68, %s71
      %p80 = scmp.eq.s32.totalorder %s23, 1
      %p81 = por %p79, %p80
      %p82 = scmp.ne.s32.totalorder %s71, %s72
      %p83 = scmp.eq.s32.totalorder %s23, 0
      %p84 = por %p82, %p83
      %p85 = scmp.ne.s32.totalorder %s71, %s72
      %p86 = scmp.eq.s32.totalorder %s24, 1
      %p87 = por %p85, %p86
      %p89 = scmp.ne.s32.totalorder %s72, %s88
      %p90 = scmp.eq.s32.totalorder %s24, 0
      %p91 = por %p89, %p90
      %s92 = ssub.s32 %s26, %s33
      %p93 = scmp.eq.s32.totalorder %s92, 0
      %s95 = sadd.s32 %s94, 1
      %s96 = scalar_select %p93, %s94, %s95
      %p99 = pneg %p93
      %p100 = scmp.eq.s32.totalorder %s18, 1
      %p101 = por %p99, %p100
      %p102 = scmp.ne.s32.totalorder %s94, %s97
      %p103 = scmp.eq.s32.totalorder %s18, 0
      %p104 = por %p102, %p103
      %p105 = scmp.ne.s32.totalorder %s94, %s97
      %p106 = scmp.eq.s32.totalorder %s23, 1
      %p107 = por %p105, %p106
      %p108 = scmp.ne.s32.totalorder %s97, %s98
      %p109 = scmp.eq.s32.totalorder %s23, 0
      %p110 = por %p108, %p109
      %p111 = scmp.ne.s32.totalorder %s97, %s98
      %p112 = scmp.eq.s32.totalorder %s24, 1
      %p113 = por %p111, %p112
      %p115 = scmp.ne.s32.totalorder %s98, %s114
      %p116 = scmp.eq.s32.totalorder %s24, 0
      %p117 = por %p115, %p116
      %s118 = ssub.s32 %s25, %s37
      %s119 = ssub.s32 %s26, %s33
      %s120 = sor.u32 %s118, %s119
      %p121 = scmp.eq.s32.totalorder %s120, 0
      %s123 = sadd.s32 %s122, 1
      %s124 = scalar_select %p121, %s122, %s123
      %p127 = pneg %p121
      %p128 = scmp.eq.s32.totalorder %s18, 1
      %p129 = por %p127, %p128
      %p130 = scmp.ne.s32.totalorder %s122, %s125
      %p131 = scmp.eq.s32.totalorder %s18, 0
      %p132 = por %p130, %p131
      %p133 = scmp.ne.s32.totalorder %s122, %s125
      %p134 = scmp.eq.s32.totalorder %s23, 1
      %p135 = por %p133, %p134
      %p136 = scmp.ne.s32.totalorder %s125, %s126
      %p137 = scmp.eq.s32.totalorder %s23, 0
      %p138 = por %p136, %p137
      %p139 = scmp.ne.s32.totalorder %s125, %s126
      %p140 = scmp.eq.s32.totalorder %s24, 1
      %p141 = por %p139, %p140
      %p143 = scmp.ne.s32.totalorder %s126, %s142
      %p144 = scmp.eq.s32.totalorder %s24, 0
      %p145 = por %p143, %p144
      %p146 = scmp.le.s32.totalorder 1, %s18
      %p147 = scmp.lt.s32.totalorder %s18, 3
      %p148 = pnand %p146, %p147
      %p149 = pneg %p148
      // Predicated region
      $region9: #{tpu_custom_call.1} parent=5 // pred_check
        _
      $region10: #{tpu_custom_call.1} parent=5 // pred_check_branch
        %151 = sbr.rel (%p148) target = $region12
      $region11: #{tpu_custom_call.1} parent=5 // pred_region
        %s152 = ssub.s32 %s18, 1
        // Predicated region
        $region13: #{tpu_custom_call.1} parent=11 // pred_check
          %p153 = pneg %p110
        $region14: #{tpu_custom_call.1} parent=11 // pred_check_branch
          %155 = sbr.rel (%p153) target = $region16
        $region15: #{tpu_custom_call.1} parent=11 // pred_region
          %s157 = ssub.s32 16, 16
          %158 = vsyncadd [#allocation7], %s157
          %s159 = smul.addr %s28, 16
          %s160 = scalar_lea.hbm %s2, %s159
          %s162 = sshll.u32 [#allocation8], 4
          %s163 = int_to_ptr.vmem [resolvable:$true] %s162
          %165 = dma.hbm_to_vmem [thread:$0]  %s160, 16, %s163, [#allocation7]
        $region16: #{tpu_custom_call.1} parent=11 // pred_fallthru
          _
      $region12: #{tpu_custom_call.1} parent=5 // pred_fallthru
        _
      %p166 = scmp.lt.s32.totalorder %s18, 2
      // Predicated region
      $region17: #{tpu_custom_call.1} parent=5 // pred_check
        %p167 = pneg %p166
      $region18: #{tpu_custom_call.1} parent=5 // pred_check_branch
        %169 = sbr.rel (%p167) target = $region20
      $region19: #{tpu_custom_call.1} parent=5 // pred_region
        // Predicated region
        $region21: #{tpu_custom_call.1} parent=19 // pred_check
          %p170 = pneg %p52
        $region22: #{tpu_custom_call.1} parent=19 // pred_check_branch
          %172 = sbr.rel (%p170) target = $region24
        $region23: #{tpu_custom_call.1} parent=19 // pred_region
          %s173 = sand.u32 %s42, 1
          %s174 = scalar_lea.sflag [#allocation4], %s173
          %s175 = sand.u32 %s42, 1
          %s176 = smul.addr %s175, 16
          %s177 = scalar_lea.vmem [#allocation3], %s176
          %s179 = ssub.s32 256, 256
          %180 = vsyncadd %s174, %s179
          %s181 = smul.addr %s25, 2
          %s182 = sadd.s32 %s26, %s181
          %s183 = smul.addr %s182, 128
          %s184 = scalar_lea.hbm %s0, %s183
          %s185 = sshll.u32 %s177, 4
          %s186 = int_to_ptr.vmem [resolvable:$true] %s185
          %191 = dma.hbm_to_vmem [thread:$0]  %s184, 256, %s186, %s174, 128, 128, 8
        $region24: #{tpu_custom_call.1} parent=19 // pred_fallthru
          _
        // Predicated region
        $region25: #{tpu_custom_call.1} parent=19 // pred_check
          %p192 = pneg %p78
        $region26: #{tpu_custom_call.1} parent=19 // pred_check_branch
          %194 = sbr.rel (%p192) target = $region28
        $region27: #{tpu_custom_call.1} parent=19 // pred_region
          %s195 = sand.u32 %s18, 1
          %s196 = scalar_lea.sflag [#allocation7], %s195
          %s197 = sand.u32 %s68, 1
          %s198 = smul.addr %s197, 48
          %s199 = scalar_lea.vmem [#allocation6], %s198
          %s201 = ssub.s32 768, 768
          %202 = vsyncadd %s196, %s201
          %s203 = smul.addr %s25, 6
          %s204 = smul.addr %s203, 128
          %s205 = scalar_lea.hbm %s1, %s204
          %s206 = sshll.u32 %s199, 4
          %s207 = int_to_ptr.vmem [resolvable:$true] %s206
          %212 = dma.hbm_to_vmem [thread:$0]  %s205, 768, %s207, %s196, 128, 128, 8
        $region28: #{tpu_custom_call.1} parent=19 // pred_fallthru
          _
      $region20: #{tpu_custom_call.1} parent=5 // pred_fallthru
        _
      %p213 = scmp.le.s32.totalorder 1, %s18
      %p214 = scmp.lt.s32.totalorder %s18, 3
      %p215 = pnand %p213, %p214
      %p216 = pneg %p215
      // Predicated region
      $region29: #{tpu_custom_call.1} parent=5 // pred_check
        _
      $region30: #{tpu_custom_call.1} parent=5 // pred_check_branch
        %218 = sbr.rel (%p215) target = $region32
      $region31: #{tpu_custom_call.1} parent=5 // pred_region
        %s219 = ssub.s32 %s18, 1
        %s220 = sand.u32 %s45, 1
        %s221 = scalar_lea.sflag [#allocation4], %s220
        %s222 = sand.u32 %s45, 1
        %s223 = smul.addr %s222, 16
        %s224 = scalar_lea.vmem [#allocation3], %s223
        // Predicated region
        $region33: #{tpu_custom_call.1} parent=31 // pred_check
          %p225 = pneg %p58
        $region34: #{tpu_custom_call.1} parent=31 // pred_check_branch
          %227 = sbr.rel (%p225) target = $region36
        $region35: #{tpu_custom_call.1} parent=31 // pred_region
          %228 = dma.done %s221, 256
        $region36: #{tpu_custom_call.1} parent=31 // pred_fallthru
          _
        %s229 = sand.u32 %s23, 1
        %s230 = scalar_lea.sflag [#allocation7], %s229
        %s231 = sand.u32 %s71, 1
        %s232 = smul.addr %s231, 48
        %s233 = scalar_lea.vmem [#allocation6], %s232
        // Predicated region
        $region37: #{tpu_custom_call.1} parent=31 // pred_check
          %p234 = pneg %p84
        $region38: #{tpu_custom_call.1} parent=31 // pred_check_branch
          %236 = sbr.rel (%p234) target = $region40
        $region39: #{tpu_custom_call.1} parent=31 // pred_region
          %237 = dma.done %s230, 768
        $region40: #{tpu_custom_call.1} parent=31 // pred_fallthru
          _
        // Predicated region
        $region41: #{tpu_custom_call.1} parent=31 // pred_check
          %p238 = pneg %p110
        $region42: #{tpu_custom_call.1} parent=31 // pred_check_branch
          %240 = sbr.rel (%p238) target = $region44
        $region43: #{tpu_custom_call.1} parent=31 // pred_region
          %241 = dma.done [#allocation7], 16
        $region44: #{tpu_custom_call.1} parent=31 // pred_fallthru
          _
        %s242 = sand.u32 %s45, 1
        %s243 = scalar_lea.sflag [#allocation4], %s242
        %s244 = sand.u32 %s45, 1
        %s245 = smul.addr %s244, 16
        %s246 = scalar_lea.vmem [#allocation3], %s245
        %p247 = pneg %p58
        %p248 = pneg %p55
        %s249 = sand.u32 %s23, 1
        %s250 = scalar_lea.sflag [#allocation7], %s249
        %s251 = sand.u32 %s71, 1
        %s252 = smul.addr %s251, 48
        %s253 = scalar_lea.vmem [#allocation6], %s252
        %p254 = pneg %p84
        %p255 = pneg %p81
        %p256 = pneg %p110
        %p257 = pneg %p107
        %p258 = pneg %p138
        %p259 = pneg %p135
        %s260 = sand.u32 %s125, 1
        %s261 = scalar_lea.sflag [#allocation5], %s260
        %s262 = sand.u32 %s125, 1
        %s263 = smul.addr %s262, 16
        %s264 = scalar_lea.vmem [#allocation9], %s263
        %v266 = vlaneseq
        %v267 = vand.u32 %v266, 127
        %s268 = smul.u32 %s28, 32
        %v269 = vstv %s268
        %v270 = vadd.s32 %v267, %v269
        %v271 = vlaneseq
        %v272 = vshrl.u32 %v271, 7
        %v273 = vadd.s32 %v272, 8
        %v274 = vmul.u32 %v272, 8
        %v275 = vmul.u32 %v273, 8
        %vm276 = vcmp.ge.s32.totalorder %v270, %v274
        %vm277 = vcmp.ge.s32.totalorder %v270, %v275
        %v278 = vadd.s32 %v274, 8
        %v279 = vadd.s32 %v275, 8
        %vm280 = vcmp.lt.s32.totalorder %v270, %v278
        %vm281 = vcmp.lt.s32.totalorder %v270, %v279
        %vm282 = vmand %vm276, %vm280
        %vm283 = vmand %vm277, %vm281
        %v284 = vsel %vm282, 1.0, 0.0
        %v285 = vsel %vm283, 1.0, 0.0
        %v286 = vpack.c.bf16 %v285, %v284
        %v287 = vld [vmem:[#allocation8] sm:$0x1]
        %v289 = vlaneseq
        %v290 = vshrl.u32 %v289, 7
        %v291 = vsub.s32 0, %v290
        %v292 = vrot.slane %v287, %v291
        %vm294 = vcmask 261120
        %295 = vst.msk [vmem:[#allocation2] sm:$0xff] %vm294, %v292
        %296 = vst.msk [vmem:[#allocation2 + $0x8] sm:$0xff] %vm294, %v292
        %v297 = vld [vmem:[%s233 + $0x1] sm:$0xff]
        %v298 = vld [vmem:[%s233 + $0x9] sm:$0x7f]
        %v299 = vpack.c.bf16 %v298, %v297
        %v300 = vunpack.c.l.bf16 %v299
        %v301 = vunpack.c.h.bf16 %v299
        %v302 = vsub.f32 %v297, %v300
        %v303 = vsub.f32 %v298, %v301
        %v304 = vpack.c.bf16 %v303, %v302
        %vm305 = vcmask 130048
        %v307 = vsel %vm305, %v304, 0
        %309 = vmatprep.subr.bf16.mxu0 0
        %310 = vmatpush1.bf16.msra.mxu0 %v286
        %311 = vmatprep.subr.bf16.mxu0 0
        %312 = vmatpush1.bf16.msra.mxu0 0
        %313 = vmatprep.subr.bf16.mxu0 0
        %314 = vmatpush1.bf16.msra.mxu0 0
        %315 = vmatprep.subr.bf16.mxu0 0
        %316 = vmatpush1.bf16.msra.mxu0 0
        %317 = vmatprep.subr.bf16.mxu0 0
        %318 = vmatpush1.bf16.msra.mxu0 0
        %319 = vmatprep.subr.bf16.mxu0 0
        %320 = vmatpush1.bf16.msra.mxu0 0
        %321 = vmatprep.subr.bf16.mxu0 0
        %322 = vmatpush1.bf16.msra.mxu0 0
        %323 = vmatprep.subr.bf16.mxu0 0
        %324 = vmatpush1.bf16.msra.mxu0 0
        %325 = vmatprep.subr.bf16.mxu0 0
        %326 = vmatpush1.bf16.msra.mxu0 0
        %327 = vmatprep.subr.bf16.mxu0 0
        %328 = vmatpush1.bf16.msra.mxu0 0
        %329 = vmatprep.subr.bf16.mxu0 0
        %330 = vmatpush1.bf16.msra.mxu0 0
        %331 = vmatprep.subr.bf16.mxu0 0
        %332 = vmatpush1.bf16.msra.mxu0 0
        %333 = vmatprep.subr.bf16.mxu0 0
        %334 = vmatpush1.bf16.msra.mxu0 0
        %335 = vmatprep.subr.bf16.mxu0 0
        %336 = vmatpush1.bf16.msra.mxu0 0
        %337 = vmatprep.subr.bf16.mxu0 0
        %338 = vmatpush1.bf16.msra.mxu0 0
        %339 = vmatprep.subr.bf16.mxu0 0
        %340 = vmatpush1.bf16.msra.mxu0 0
        %341 = vmatprep.mubr.bf16.mxu0 0
        %342 = vmatmul.mubr.bf16.gmra.mrb[0].mxu0 %v307
        %v343 = vpop.f32.mrb[0].mxu0
        %v344 = vadd.f32 0.0, %v343
        %v345 = vpop.f32.mrb[0].mxu0
        %v346 = vpop.f32.mrb[0].mxu0
        %v347 = vadd.f32 0.0, %v346
        %v348 = vpop.f32.mrb[0].mxu0
        %349 = vdwg.mxu0
        %v351 = vsel %vm305, %v299, 0
        %353 = vmatprep.subr.bf16.mxu0 0
        %354 = vmatpush1.bf16.msra.mxu0 %v286
        %355 = vmatprep.subr.bf16.mxu0 0
        %356 = vmatpush1.bf16.msra.mxu0 0
        %357 = vmatprep.subr.bf16.mxu0 0
        %358 = vmatpush1.bf16.msra.mxu0 0
        %359 = vmatprep.subr.bf16.mxu0 0
        %360 = vmatpush1.bf16.msra.mxu0 0
        %361 = vmatprep.subr.bf16.mxu0 0
        %362 = vmatpush1.bf16.msra.mxu0 0
        %363 = vmatprep.subr.bf16.mxu0 0
        %364 = vmatpush1.bf16.msra.mxu0 0
        %365 = vmatprep.subr.bf16.mxu0 0
        %366 = vmatpush1.bf16.msra.mxu0 0
        %367 = vmatprep.subr.bf16.mxu0 0
        %368 = vmatpush1.bf16.msra.mxu0 0
        %369 = vmatprep.subr.bf16.mxu0 0
        %370 = vmatpush1.bf16.msra.mxu0 0
        %371 = vmatprep.subr.bf16.mxu0 0
        %372 = vmatpush1.bf16.msra.mxu0 0
        %373 = vmatprep.subr.bf16.mxu0 0
        %374 = vmatpush1.bf16.msra.mxu0 0
        %375 = vmatprep.subr.bf16.mxu0 0
        %376 = vmatpush1.bf16.msra.mxu0 0
        %377 = vmatprep.subr.bf16.mxu0 0
        %378 = vmatpush1.bf16.msra.mxu0 0
        %379 = vmatprep.subr.bf16.mxu0 0
        %380 = vmatpush1.bf16.msra.mxu0 0
        %381 = vmatprep.subr.bf16.mxu0 0
        %382 = vmatpush1.bf16.msra.mxu0 0
        %383 = vmatprep.subr.bf16.mxu0 0
        %384 = vmatpush1.bf16.msra.mxu0 0
        %385 = vmatprep.mubr.bf16.mxu0 0
        %386 = vmatmul.mubr.bf16.gmra.mrb[0].mxu0 %v351
        %v387 = vpop.f32.mrb[0].mxu0
        %v388 = vadd.f32 %v344, %v387
        %v389 = vpop.f32.mrb[0].mxu0
        %v390 = vpop.f32.mrb[0].mxu0
        %v391 = vadd.f32 %v347, %v390
        %v392 = vpop.f32.mrb[0].mxu0
        %393 = vdwg.mxu0
        %v394 = vld [vmem:[%s224] sm:$0xff]
        %v395 = vld [vmem:[%s224 + $0x8] sm:$0x7f]
        %v396 = vld [vmem:[#allocation2 + $0x1] sm:$0xff]
        %v397 = vld [vmem:[#allocation2 + $0x9] sm:$0x7f]
        %v398 = vmul.f32 %v388, %v394
        %v399 = vmul.f32 %v391, %v395
        %v400 = vadd.f32 %v396, %v398
        %v401 = vadd.f32 %v397, %v399
        %402 = vst.msk [vmem:[#allocation2 + $0x1] sm:$0xff] %vm294, %v400
        %vm403 = vcmask 260096
        %404 = vst.msk [vmem:[#allocation2 + $0x9] sm:$0x7f] %vm403, %v401
        %s405 = scalar_lea.vmem %s233, 16 [#allocation6]
        %v406 = vld [vmem:[%s405] sm:$0xff]
        %v407 = vld [vmem:[%s405 + $0x8] sm:$0xff]
        %v408 = vpack.c.bf16 %v407, %v406
        %v409 = vunpack.c.l.bf16 %v408
        %v410 = vunpack.c.h.bf16 %v408
        %v411 = vsub.f32 %v406, %v409
        %v412 = vsub.f32 %v407, %v410
        %v413 = vpack.c.bf16 %v412, %v411
        %v415 = vsel %vm305, %v413, 0
        %417 = vmatprep.subr.bf16.mxu0 0
        %418 = vmatpush1.bf16.msra.mxu0 %v286
        %419 = vmatprep.subr.bf16.mxu0 0
        %420 = vmatpush1.bf16.msra.mxu0 0
        %421 = vmatprep.subr.bf16.mxu0 0
        %422 = vmatpush1.bf16.msra.mxu0 0
        %423 = vmatprep.subr.bf16.mxu0 0
        %424 = vmatpush1.bf16.msra.mxu0 0
        %425 = vmatprep.subr.bf16.mxu0 0
        %426 = vmatpush1.bf16.msra.mxu0 0
        %427 = vmatprep.subr.bf16.mxu0 0
        %428 = vmatpush1.bf16.msra.mxu0 0
        %429 = vmatprep.subr.bf16.mxu0 0
        %430 = vmatpush1.bf16.msra.mxu0 0
        %431 = vmatprep.subr.bf16.mxu0 0
        %432 = vmatpush1.bf16.msra.mxu0 0
        %433 = vmatprep.subr.bf16.mxu0 0
        %434 = vmatpush1.bf16.msra.mxu0 0
        %435 = vmatprep.subr.bf16.mxu0 0
        %436 = vmatpush1.bf16.msra.mxu0 0
        %437 = vmatprep.subr.bf16.mxu0 0
        %438 = vmatpush1.bf16.msra.mxu0 0
        %439 = vmatprep.subr.bf16.mxu0 0
        %440 = vmatpush1.bf16.msra.mxu0 0
        %441 = vmatprep.subr.bf16.mxu0 0
        %442 = vmatpush1.bf16.msra.mxu0 0
        %443 = vmatprep.subr.bf16.mxu0 0
        %444 = vmatpush1.bf16.msra.mxu0 0
        %445 = vmatprep.subr.bf16.mxu0 0
        %446 = vmatpush1.bf16.msra.mxu0 0
        %447 = vmatprep.subr.bf16.mxu0 0
        %448 = vmatpush1.bf16.msra.mxu0 0
        %449 = vmatprep.mubr.bf16.mxu0 0
        %450 = vmatmul.mubr.bf16.gmra.mrb[0].mxu0 %v415
        %v451 = vpop.f32.mrb[0].mxu0
        %v452 = vadd.f32 0.0, %v451
        %v453 = vpop.f32.mrb[0].mxu0
        %v454 = vpop.f32.mrb[0].mxu0
        %v455 = vadd.f32 0.0, %v454
        %v456 = vpop.f32.mrb[0].mxu0
        %457 = vdwg.mxu0
        %v459 = vsel %vm305, %v408, 0
        %461 = vmatprep.subr.bf16.mxu0 0
        %462 = vmatpush1.bf16.msra.mxu0 %v286
        %463 = vmatprep.subr.bf16.mxu0 0
        %464 = vmatpush1.bf16.msra.mxu0 0
        %465 = vmatprep.subr.bf16.mxu0 0
        %466 = vmatpush1.bf16.msra.mxu0 0
        %467 = vmatprep.subr.bf16.mxu0 0
        %468 = vmatpush1.bf16.msra.mxu0 0
        %469 = vmatprep.subr.bf16.mxu0 0
        %470 = vmatpush1.bf16.msra.mxu0 0
        %471 = vmatprep.subr.bf16.mxu0 0
        %472 = vmatpush1.bf16.msra.mxu0 0
        %473 = vmatprep.subr.bf16.mxu0 0
        %474 = vmatpush1.bf16.msra.mxu0 0
        %475 = vmatprep.subr.bf16.mxu0 0
        %476 = vmatpush1.bf16.msra.mxu0 0
        %477 = vmatprep.subr.bf16.mxu0 0
        %478 = vmatpush1.bf16.msra.mxu0 0
        %479 = vmatprep.subr.bf16.mxu0 0
        %480 = vmatpush1.bf16.msra.mxu0 0
        %481 = vmatprep.subr.bf16.mxu0 0
        %482 = vmatpush1.bf16.msra.mxu0 0
        %483 = vmatprep.subr.bf16.mxu0 0
        %484 = vmatpush1.bf16.msra.mxu0 0
        %485 = vmatprep.subr.bf16.mxu0 0
        %486 = vmatpush1.bf16.msra.mxu0 0
        %487 = vmatprep.subr.bf16.mxu0 0
        %488 = vmatpush1.bf16.msra.mxu0 0
        %489 = vmatprep.subr.bf16.mxu0 0
        %490 = vmatpush1.bf16.msra.mxu0 0
        %491 = vmatprep.subr.bf16.mxu0 0
        %492 = vmatpush1.bf16.msra.mxu0 0
        %493 = vmatprep.mubr.bf16.mxu0 0
        %494 = vmatmul.mubr.bf16.gmra.mrb[0].mxu0 %v459
        %v495 = vpop.f32.mrb[0].mxu0
        %v496 = vadd.f32 %v452, %v495
        %v497 = vpop.f32.mrb[0].mxu0
        %v498 = vpop.f32.mrb[0].mxu0
        %v499 = vadd.f32 %v455, %v498
        %v500 = vpop.f32.mrb[0].mxu0
        %501 = vdwg.mxu0
        %v502 = vld [vmem:[%s224] sm:$0xff]
        %v503 = vld [vmem:[%s224 + $0x8] sm:$0xff]
        %v504 = vld [vmem:[#allocation2] sm:$0xff]
        %v505 = vld [vmem:[#allocation2 + $0x8] sm:$0xff]
        %v506 = vmul.f32 %v496, %v502
        %v507 = vmul.f32 %v499, %v503
        %v508 = vadd.f32 %v504, %v506
        %v509 = vadd.f32 %v505, %v507
        %510 = vst.msk [vmem:[#allocation2] sm:$0xff] %vm294, %v508
        %511 = vst.msk [vmem:[#allocation2 + $0x8] sm:$0xff] %vm294, %v509
        %s512 = scalar_lea.vmem %s233, 32 [#allocation6]
        %v513 = vld [vmem:[%s512] sm:$0xff]
        %v514 = vld [vmem:[%s512 + $0x8] sm:$0x7f]
        %v515 = vpack.c.bf16 %v514, %v513
        %v516 = vunpack.c.l.bf16 %v515
        %v517 = vunpack.c.h.bf16 %v515
        %v518 = vsub.f32 %v513, %v516
        %v519 = vsub.f32 %v514, %v517
        %v520 = vpack.c.bf16 %v519, %v518
        %v522 = vsel %vm305, %v520, 0
        %524 = vmatprep.subr.bf16.mxu0 0
        %525 = vmatpush1.bf16.msra.mxu0 %v286
        %526 = vmatprep.subr.bf16.mxu0 0
        %527 = vmatpush1.bf16.msra.mxu0 0
        %528 = vmatprep.subr.bf16.mxu0 0
        %529 = vmatpush1.bf16.msra.mxu0 0
        %530 = vmatprep.subr.bf16.mxu0 0
        %531 = vmatpush1.bf16.msra.mxu0 0
        %532 = vmatprep.subr.bf16.mxu0 0
        %533 = vmatpush1.bf16.msra.mxu0 0
        %534 = vmatprep.subr.bf16.mxu0 0
        %535 = vmatpush1.bf16.msra.mxu0 0
        %536 = vmatprep.subr.bf16.mxu0 0
        %537 = vmatpush1.bf16.msra.mxu0 0
        %538 = vmatprep.subr.bf16.mxu0 0
        %539 = vmatpush1.bf16.msra.mxu0 0
        %540 = vmatprep.subr.bf16.mxu0 0
        %541 = vmatpush1.bf16.msra.mxu0 0
        %542 = vmatprep.subr.bf16.mxu0 0
        %543 = vmatpush1.bf16.msra.mxu0 0
        %544 = vmatprep.subr.bf16.mxu0 0
        %545 = vmatpush1.bf16.msra.mxu0 0
        %546 = vmatprep.subr.bf16.mxu0 0
        %547 = vmatpush1.bf16.msra.mxu0 0
        %548 = vmatprep.subr.bf16.mxu0 0
        %549 = vmatpush1.bf16.msra.mxu0 0
        %550 = vmatprep.subr.bf16.mxu0 0
        %551 = vmatpush1.bf16.msra.mxu0 0
        %552 = vmatprep.subr.bf16.mxu0 0
        %553 = vmatpush1.bf16.msra.mxu0 0
        %554 = vmatprep.subr.bf16.mxu0 0
        %555 = vmatpush1.bf16.msra.mxu0 0
        %556 = vmatprep.mubr.bf16.mxu0 0
        %557 = vmatmul.mubr.bf16.gmra.mrb[0].mxu0 %v522
        %v558 = vpop.f32.mrb[0].mxu0
        %v559 = vadd.f32 0.0, %v558
        %v560 = vpop.f32.mrb[0].mxu0
        %v561 = vpop.f32.mrb[0].mxu0
        %v562 = vadd.f32 0.0, %v561
        %v563 = vpop.f32.mrb[0].mxu0
        %564 = vdwg.mxu0
        %v566 = vsel %vm305, %v515, 0
        %568 = vmatprep.subr.bf16.mxu0 0
        %569 = vmatpush1.bf16.msra.mxu0 %v286
        %570 = vmatprep.subr.bf16.mxu0 0
        %571 = vmatpush1.bf16.msra.mxu0 0
        %572 = vmatprep.subr.bf16.mxu0 0
        %573 = vmatpush1.bf16.msra.mxu0 0
        %574 = vmatprep.subr.bf16.mxu0 0
        %575 = vmatpush1.bf16.msra.mxu0 0
        %576 = vmatprep.subr.bf16.mxu0 0
        %577 = vmatpush1.bf16.msra.mxu0 0
        %578 = vmatprep.subr.bf16.mxu0 0
        %579 = vmatpush1.bf16.msra.mxu0 0
        %580 = vmatprep.subr.bf16.mxu0 0
        %581 = vmatpush1.bf16.msra.mxu0 0
        %582 = vmatprep.subr.bf16.mxu0 0
        %583 = vmatpush1.bf16.msra.mxu0 0
        %584 = vmatprep.subr.bf16.mxu0 0
        %585 = vmatpush1.bf16.msra.mxu0 0
        %586 = vmatprep.subr.bf16.mxu0 0
        %587 = vmatpush1.bf16.msra.mxu0 0
        %588 = vmatprep.subr.bf16.mxu0 0
        %589 = vmatpush1.bf16.msra.mxu0 0
        %590 = vmatprep.subr.bf16.mxu0 0
        %591 = vmatpush1.bf16.msra.mxu0 0
        %592 = vmatprep.subr.bf16.mxu0 0
        %593 = vmatpush1.bf16.msra.mxu0 0
        %594 = vmatprep.subr.bf16.mxu0 0
        %595 = vmatpush1.bf16.msra.mxu0 0
        %596 = vmatprep.subr.bf16.mxu0 0
        %597 = vmatpush1.bf16.msra.mxu0 0
        %598 = vmatprep.subr.bf16.mxu0 0
        %599 = vmatpush1.bf16.msra.mxu0 0
        %600 = vmatprep.mubr.bf16.mxu0 0
        %601 = vmatmul.mubr.bf16.gmra.mrb[0].mxu0 %v566
        %v602 = vpop.f32.mrb[0].mxu0
        %v603 = vadd.f32 %v559, %v602
        %v604 = vpop.f32.mrb[0].mxu0
        %v605 = vpop.f32.mrb[0].mxu0
        %v606 = vadd.f32 %v562, %v605
        %v607 = vpop.f32.mrb[0].mxu0
        %608 = vdwg.mxu0
        %v609 = vld [vmem:[%s224 + $0x1] sm:$0xff]
        %v610 = vld [vmem:[%s224 + $0x9] sm:$0x7f]
        %v611 = vld [vmem:[#allocation2] sm:$0xff]
        %v612 = vld [vmem:[#allocation2 + $0x8] sm:$0x7f]
        %v613 = vmul.f32 %v603, %v609
        %v614 = vmul.f32 %v606, %v610
        %v615 = vadd.f32 %v611, %v613
        %v616 = vadd.f32 %v612, %v614
        %617 = vst.msk [vmem:[#allocation2] sm:$0xff] %vm294, %v615
        %618 = vst.msk [vmem:[#allocation2 + $0x8] sm:$0x7f] %vm403, %v616
        %v619 = vld [vmem:[#allocation2] sm:$0xff]
        %v620 = vld [vmem:[#allocation2 + $0x8] sm:$0xff]
        %621 = vst.msk [vmem:[%s264] sm:$0xff] %vm294, %v619
        %622 = vst.msk [vmem:[%s264 + $0x8] sm:$0xff] %vm294, %v620
        %s623 = sand.u32 %s125, 1
        %s624 = scalar_lea.sflag [#allocation5], %s623
        %s625 = sand.u32 %s125, 1
        %s626 = smul.addr %s625, 16
        %s627 = scalar_lea.vmem [#allocation9], %s626
        // Predicated region
        $region45: #{tpu_custom_call.1} parent=31 // pred_check
          %p628 = pneg %p135
        $region46: #{tpu_custom_call.1} parent=31 // pred_check_branch
          %630 = sbr.rel (%p628) target = $region48
        $region47: #{tpu_custom_call.1} parent=31 // pred_region
          %s632 = ssub.s32 256, 256
          %633 = vsyncadd %s624, %s632
          %s634 = smul.addr %s27, 2
          %s635 = sadd.s32 %s28, %s634
          %s636 = smul.addr %s635, 128
          %s637 = scalar_lea.hbm %s3, %s636
          %s638 = sshll.u32 %s627, 4
          %s639 = int_to_ptr.vmem [resolvable:$true] %s638
          %644 = dma.vmem_to_hbm [thread:$0]  %s639, 256, %s637, %s624, 128, 128, 8
        $region48: #{tpu_custom_call.1} parent=31 // pred_fallthru
          _
      $region32: #{tpu_custom_call.1} parent=5 // pred_fallthru
        _
      %p645 = scmp.le.s32.totalorder 2, %s18
      // Predicated region
      $region49: #{tpu_custom_call.1} parent=5 // pred_check
        %p646 = pneg %p645
      $region50: #{tpu_custom_call.1} parent=5 // pred_check_branch
        %648 = sbr.rel (%p646) target = $region52
      $region51: #{tpu_custom_call.1} parent=5 // pred_region
        %s649 = ssub.s32 %s18, 2
        // Predicated region
        $region53: #{tpu_custom_call.1} parent=51 // pred_check
          %p650 = pneg %p141
        $region54: #{tpu_custom_call.1} parent=51 // pred_check_branch
          %652 = sbr.rel (%p650) target = $region56
        $region55: #{tpu_custom_call.1} parent=51 // pred_region
          %s653 = sand.u32 %s126, 1
          %s654 = scalar_lea.sflag [#allocation5], %s653
          %s655 = sand.u32 %s126, 1
          %s656 = smul.addr %s655, 16
          %s657 = scalar_lea.vmem [#allocation9], %s656
          %658 = dma.done %s654, 256
        $region56: #{tpu_custom_call.1} parent=51 // pred_fallthru
          _
      $region52: #{tpu_custom_call.1} parent=5 // pred_fallthru
        _
    $region6: #{tpu_custom_call.1} parent=1 // loop_footer
      %s22 = sadd.s32 1, %s18
    $region7: #{tpu_custom_call.1} parent=1 // loop_footer_branch
      %17 = sbr.rel target = $region3
    $region8: #{tpu_custom_call.1} parent=1 // loop_exit
      _
    %659 = vsyncpa [#allocation4], 1
    %s660 = scalar_lea.sflag [#allocation4], 1
    %661 = vsyncpa %s660, 1
    %662 = vsyncpa [#allocation7], 1
    %s663 = scalar_lea.sflag [#allocation7], 1
    %664 = vsyncpa %s663, 1
    %665 = vsyncpa [#allocation5], 1
    %s666 = scalar_lea.sflag [#allocation5], 1
    %667 = vsyncpa %s666, 1

</llo_original>
